<compile_context>
chip_gen: v5e
topology: v5e:2x2
jax: 0.10.0
libtpu: 0.0.40
codegen_flags: <defaults>
</compile_context>

<pallas_src>
import math

import jax
import jax.numpy as jnp
from jax import lax
from jax.experimental import pallas as pl
from jax.experimental.pallas import tpu as pltpu

LN_EPS = 1e-5                      # torch.nn.LayerNorm default
INV_SQRT2 = 1.0 / math.sqrt(2.0)
_TILE_S_MAX = 16384                # lane-dim tile cap (multiple of 128)
_TILE_BYTES_MAX = 4 * 1024 * 1024  # per-tile f32 compute footprint budget


def crosstalk_kernel(x_ref, w_ref, gamma_ref, beta_ref, o_ref):
    # x_ref:     (C, TS)  channels on sublanes, pixels on lanes (native I/O dtype)
    # w_ref:     (C, C)   dense block-diagonal grouped-conv weight, (out, in), f32
    # gamma_ref: (C, 1)   LayerNorm weight (f32)
    # beta_ref:  (C, 1)   LayerNorm bias   (f32)
    # o_ref:     (C, TS)  native I/O dtype
    x = x_ref[...].astype(jnp.float32)
    w = w_ref[...]

    # grouped 1x1 conv == block-diagonal matmul (weight already oriented (out, in)).
    # TODO(synk): for large C (cg >= 128) contract per group instead of the dense
    # block-diagonal weight to avoid wasting MXU FLOPs / VMEM on zero blocks.
    y = jnp.dot(w, x, preferred_element_type=jnp.float32)          # (C, TS)

    # Channel LayerNorm over the sublane (C) axis -- centered two-pass variance.
    inv_c = 1.0 / y.shape[0]
    mean = jnp.sum(y, axis=0, keepdims=True) * inv_c                # (1, TS)
    yc = y - mean
    var = jnp.sum(yc * yc, axis=0, keepdims=True) * inv_c           # (1, TS)
    inv_std = lax.rsqrt(var + LN_EPS)
    z = yc * inv_std * gamma_ref[...] + beta_ref[...]               # (C,1) bcast on lanes

    # exact (erf-based) GELU, matching nn.GELU(approximate='none').
    # TODO(synk): on v7x (VALU-limited once DMA is fixed) switch to an exp/tanh
    # based erf so the transcendental rides the otherwise-idle EUP slot.
    g = 0.5 * z * (1.0 + lax.erf(z * INV_SQRT2))

    o_ref[...] = g.astype(o_ref.dtype)


@jax.jit
def crosstalk_pallas(x_nchw, w_grouped, gamma, beta):
    """x_nchw: (B, C, H, W) any float dtype. w_grouped: (C, C//groups) 1x1-conv weight."""
    B, C, H, W = x_nchw.shape
    cg = w_grouped.shape[1]
    groups = C // cg
    S = H * W

    # Dense block-diagonal (C_out, C_in) weight in one vectorized op (no scatter loop).
    wg = w_grouped.astype(jnp.float32).reshape(groups, cg, cg)
    w_dense = jnp.einsum('gij,gh->gihj', wg,
                         jnp.eye(groups, dtype=jnp.float32)).reshape(C, C)

    # NCHW is already (B, C, H*W): free reshape, keep the native dtype (no f32 cast).
    x_flat = x_nchw.reshape(B, C, S)

    # Biggest lane-dense spatial tile within the per-tile budget; no wrapper pad --
    # the ragged final tile (if any) is handled by Pallas' masked store, and the
    # LayerNorm reduction is per-lane so garbage lanes never contaminate valid ones.
    S128 = pl.cdiv(S, 128) * 128
    tile_cap = max(128, (_TILE_BYTES_MAX // (C * 4)) // 128 * 128)
    tile_s = min(_TILE_S_MAX, tile_cap, S128)
    grid_s = pl.cdiv(S, tile_s)

    gamma_c1 = gamma.reshape(C, 1).astype(jnp.float32)
    beta_c1 = beta.reshape(C, 1).astype(jnp.float32)

    io_itemsize = jnp.dtype(x_nchw.dtype).itemsize
    tile_io_bytes = C * tile_s * io_itemsize
    tile_f32_bytes = C * tile_s * 4
    # 2x double-buffered in + out tiles, ~4 live f32 intermediates, weight + params.
    vmem_needed = (2 * (2 * tile_io_bytes) + 4 * tile_f32_bytes
                   + 2 * C * C * 4 + 4 * C * 4)
    vmem_limit = int(min(max(4 * vmem_needed, 16 << 20), 32 << 20))

    cost = pl.CostEstimate(
        flops=2 * B * C * C * S + 12 * B * C * S,
        transcendentals=B * C * S,
        bytes_accessed=2 * B * C * S * io_itemsize + C * C * 4 + 2 * C * 4,
    )

    # TODO(synk): for large C, mark the weight/gamma/beta specs single-buffered
    # (invariant index_map) to reclaim the duplicate VMEM copy; negligible at small C.
    out = pl.pallas_call(
        crosstalk_kernel,
        out_shape=jax.ShapeDtypeStruct((B, C, S), x_nchw.dtype),
        grid_spec=pltpu.PrefetchScalarGridSpec(
            num_scalar_prefetch=0,
            grid=(B, grid_s),
            in_specs=[
                pl.BlockSpec((None, C, tile_s), lambda b, s: (b, 0, s)),  # x tile
                pl.BlockSpec((C, C), lambda b, s: (0, 0)),                # weight (resident)
                pl.BlockSpec((C, 1), lambda b, s: (0, 0)),                # gamma
                pl.BlockSpec((C, 1), lambda b, s: (0, 0)),                # beta
            ],
            out_specs=pl.BlockSpec((None, C, tile_s), lambda b, s: (b, 0, s)),
        ),
        compiler_params=pltpu.CompilerParams(
            dimension_semantics=("parallel", "parallel"),
            vmem_limit_bytes=vmem_limit),
        cost_estimate=cost,
    )(x_flat, w_dense, gamma_c1, beta_c1)

    return out.reshape(B, C, H, W)


def crosstalk_ref(x_nchw, w_grouped, gamma, beta):
    """Pure-JAX reference mirroring the PyTorch module (f32 math)."""
    B, C, H, W = x_nchw.shape
    cg = w_grouped.shape[1]
    groups = C // cg
    x_nhwc = jnp.transpose(x_nchw.astype(jnp.float32), (0, 2, 3, 1))   # (B,H,W,C)
    outs = []
    for g in range(groups):
        xg = x_nhwc[..., g * cg:(g + 1) * cg]
        wg = w_grouped[g * cg:(g + 1) * cg, :].astype(jnp.float32)
        outs.append(jnp.einsum('bhwi,oi->bhwo', xg, wg))
    y = jnp.concatenate(outs, axis=-1)
    mean = jnp.mean(y, axis=-1, keepdims=True)
    var = jnp.mean((y - mean) ** 2, axis=-1, keepdims=True)
    z = (y - mean) / jnp.sqrt(var + LN_EPS) * gamma + beta
    g = 0.5 * z * (1.0 + lax.erf(z / math.sqrt(2.0)))
    return jnp.transpose(g, (0, 3, 1, 2))


if __name__ == "__main__":
    key = jax.random.PRNGKey(0)
    B, C, H, W = 2, 8, 16, 16          # ch=8 -> groups = 8//4 = 2
    groups = C // 4 or 1

    k_x, k_w, k_g, k_b = jax.random.split(key, 4)
    x = jax.random.normal(k_x, (B, C, H, W), dtype=jnp.float32)
    # Conv2d(ch, ch, 1, groups=groups, bias=False) weight (C, C//groups, 1, 1) -> squeezed
    w_grouped = jax.random.normal(k_w, (C, C // groups), dtype=jnp.float32) * 0.2
    gamma = 1.0 + 0.05 * jax.random.normal(k_g, (C,), dtype=jnp.float32)
    beta = 0.05 * jax.random.normal(k_b, (C,), dtype=jnp.float32)

    # 1) f32, spatial a multiple of 128
    out = jax.block_until_ready(crosstalk_pallas(x, w_grouped, gamma, beta))
    ref = crosstalk_ref(x, w_grouped, gamma, beta)
    assert out.shape == (B, C, H, W) and out.dtype == x.dtype
    assert jnp.allclose(out, ref, atol=1e-5, rtol=1e-5), "f32 mismatch vs reference"

    # 2) ragged spatial size (S = 320): exercises the masked partial final tile
    x_rag = jax.random.normal(jax.random.PRNGKey(1), (1, C, 16, 20), dtype=jnp.float32)
    out_rag = jax.block_until_ready(crosstalk_pallas(x_rag, w_grouped, gamma, beta))
    ref_rag = crosstalk_ref(x_rag, w_grouped, gamma, beta)
    assert jnp.allclose(out_rag, ref_rag, atol=1e-5, rtol=1e-5), "ragged-tail mismatch"

    # 3) native bf16 I/O (f32 math inside the kernel)
    x_bf = x.astype(jnp.bfloat16)
    out_bf = jax.block_until_ready(crosstalk_pallas(x_bf, w_grouped, gamma, beta))
    ref_bf = crosstalk_ref(x_bf, w_grouped, gamma, beta)
    assert out_bf.dtype == jnp.bfloat16
    assert jnp.allclose(out_bf.astype(jnp.float32), ref_bf, atol=3e-2, rtol=3e-2), \
        "bf16 mismatch vs reference"

    print("KERNEL_OK")
</pallas_src>

<mosaic_0001>
module attributes {stable_mosaic.version = 11 : i64} {
  func.func @crosstalk_kernel(%arg0: i32, %arg1: i32, %arg2: memref<1x8x256xf32, #tpu.memory_space<vmem>>, %arg3: memref<8x8xf32, #tpu.memory_space<vmem>>, %arg4: memref<8x1xf32, #tpu.memory_space<vmem>>, %arg5: memref<8x1xf32, #tpu.memory_space<vmem>>, %arg6: memref<1x8x256xf32, #tpu.memory_space<vmem>>) attributes {dimension_semantics = [#tpu.dimension_semantics<parallel>, #tpu.dimension_semantics<parallel>], iteration_bounds = array<i64: 2, 1>, scalar_prefetch = 0 : i64, scratch_operands = 0 : i64, tpu.core_type = #tpu.core_type<tc>, window_params = [{transform_indices = @transform_0, window_bounds = array<i64: 1, 8, 256>}, {pipeline_mode = #tpu.pipeline_mode<synchronous>, transform_indices = @transform_1, window_bounds = array<i64: 8, 8>}, {pipeline_mode = #tpu.pipeline_mode<synchronous>, transform_indices = @transform_2, window_bounds = array<i64: 8, 1>}, {pipeline_mode = #tpu.pipeline_mode<synchronous>, transform_indices = @transform_3, window_bounds = array<i64: 8, 1>}, {transform_indices = @transform_4, window_bounds = array<i64: 1, 8, 256>}]} {
    %c0 = arith.constant 0 : index
    %c0_0 = arith.constant 0 : index
    %c0_1 = arith.constant 0 : index
    %0 = vector.load %arg2[%c0, %c0_0, %c0_1] : memref<1x8x256xf32, #tpu.memory_space<vmem>>, vector<1x8x256xf32>
    %1 = vector.shape_cast %0 : vector<1x8x256xf32> to vector<8x256xf32>
    %c0_2 = arith.constant 0 : index
    %c0_3 = arith.constant 0 : index
    %2 = vector.load %arg3[%c0_2, %c0_3] : memref<8x8xf32, #tpu.memory_space<vmem>>, vector<8x8xf32>
    %cst = arith.constant dense<0.000000e+00> : vector<8x256xf32>
    %3 = tpu.matmul %2, %1, %cst {dimension_numbers = #tpu.dot_dimension_numbers<[1], [0], [0], [1], [0, 0, 1, 1], [], []>} : vector<8x8xf32>, vector<8x256xf32>, vector<8x256xf32> -> vector<8x256xf32>
    %cst_4 = arith.constant dense<0.000000e+00> : vector<256xf32>
    %4 = vector.multi_reduction <add>, %3, %cst_4 [0] : vector<8x256xf32> to vector<256xf32>
    %5 = vector.shape_cast %4 : vector<256xf32> to vector<1x256xf32>
    %cst_5 = arith.constant 1.250000e-01 : f32
    %6 = vector.broadcast %cst_5 : f32 to vector<1x256xf32>
    %7 = arith.mulf %5, %6 : vector<1x256xf32>
    %8 = vector.broadcast %7 : vector<1x256xf32> to vector<8x256xf32>
    %9 = arith.subf %3, %8 : vector<8x256xf32>
    %10 = arith.mulf %9, %9 : vector<8x256xf32>
    %cst_6 = arith.constant dense<0.000000e+00> : vector<256xf32>
    %11 = vector.multi_reduction <add>, %10, %cst_6 [0] : vector<8x256xf32> to vector<256xf32>
    %12 = vector.shape_cast %11 : vector<256xf32> to vector<1x256xf32>
    %cst_7 = arith.constant 1.250000e-01 : f32
    %13 = vector.broadcast %cst_7 : f32 to vector<1x256xf32>
    %14 = arith.mulf %12, %13 : vector<1x256xf32>
    %cst_8 = arith.constant 9.99999974E-6 : f32
    %15 = vector.broadcast %cst_8 : f32 to vector<1x256xf32>
    %16 = arith.addf %14, %15 : vector<1x256xf32>
    %17 = math.rsqrt %16 : vector<1x256xf32>
    %18 = vector.broadcast %17 : vector<1x256xf32> to vector<8x256xf32>
    %19 = arith.mulf %9, %18 : vector<8x256xf32>
    %c0_9 = arith.constant 0 : index
    %c0_10 = arith.constant 0 : index
    %20 = vector.load %arg4[%c0_9, %c0_10] : memref<8x1xf32, #tpu.memory_space<vmem>>, vector<8x1xf32>
    %21 = vector.broadcast %20 : vector<8x1xf32> to vector<8x256xf32>
    %22 = arith.mulf %19, %21 : vector<8x256xf32>
    %c0_11 = arith.constant 0 : index
    %c0_12 = arith.constant 0 : index
    %23 = vector.load %arg5[%c0_11, %c0_12] : memref<8x1xf32, #tpu.memory_space<vmem>>, vector<8x1xf32>
    %24 = vector.broadcast %23 : vector<8x1xf32> to vector<8x256xf32>
    %25 = arith.addf %22, %24 : vector<8x256xf32>
    %cst_13 = arith.constant 5.000000e-01 : f32
    %26 = vector.broadcast %cst_13 : f32 to vector<8x256xf32>
    %27 = arith.mulf %26, %25 : vector<8x256xf32>
    %cst_14 = arith.constant 0.707106769 : f32
    %28 = vector.broadcast %cst_14 : f32 to vector<8x256xf32>
    %29 = arith.mulf %25, %28 : vector<8x256xf32>
    %30 = math.erf %29 : vector<8x256xf32>
    %cst_15 = arith.constant 1.000000e+00 : f32
    %31 = vector.broadcast %cst_15 : f32 to vector<8x256xf32>
    %32 = arith.addf %31, %30 : vector<8x256xf32>
    %33 = arith.mulf %27, %32 : vector<8x256xf32>
    %c0_16 = arith.constant 0 : index
    %c0_17 = arith.constant 0 : index
    %c0_18 = arith.constant 0 : index
    %34 = vector.load %arg6[%c0_16, %c0_17, %c0_18] : memref<1x8x256xf32, #tpu.memory_space<vmem>>, vector<1x8x256xf32>
    %35 = vector.shape_cast %34 : vector<1x8x256xf32> to vector<8x256xf32>
    %36 = vector.shape_cast %33 : vector<8x256xf32> to vector<1x8x256xf32>
    tpu.vector_store %arg6[%c0_16, %c0_17, %c0_18], %36 {strides = array<i32>} : memref<1x8x256xf32, #tpu.memory_space<vmem>>, vector<1x8x256xf32>,
    return
  }
  func.func @transform_0(%arg0: i32, %arg1: i32) -> (i32, i32, i32) {
    %c0_i32 = arith.constant 0 : i32
    %c0_i32_0 = arith.constant 0 : i32
    return %arg0, %c0_i32, %arg1 : i32, i32, i32
  }
  func.func @transform_1(%arg0: i32, %arg1: i32) -> (i32, i32) {
    %c0_i32 = arith.constant 0 : i32
    %c0_i32_0 = arith.constant 0 : i32
    %c0_i32_1 = arith.constant 0 : i32
    return %c0_i32, %c0_i32_0 : i32, i32
  }
  func.func @transform_2(%arg0: i32, %arg1: i32) -> (i32, i32) {
    %c0_i32 = arith.constant 0 : i32
    %c0_i32_0 = arith.constant 0 : i32
    %c0_i32_1 = arith.constant 0 : i32
    return %c0_i32, %c0_i32_0 : i32, i32
  }
  func.func @transform_3(%arg0: i32, %arg1: i32) -> (i32, i32) {
    %c0_i32 = arith.constant 0 : i32
    %c0_i32_0 = arith.constant 0 : i32
    %c0_i32_1 = arith.constant 0 : i32
    return %c0_i32, %c0_i32_0 : i32, i32
  }
  func.func @transform_4(%arg0: i32, %arg1: i32) -> (i32, i32, i32) {
    %c0_i32 = arith.constant 0 : i32
    %c0_i32_0 = arith.constant 0 : i32
    return %arg0, %c0_i32, %arg1 : i32, i32, i32
  }
}

</mosaic_0001>

<llo_original>
// kernel: crosstalk_pallas.1
$region0: #{crosstalk_pallas.1}
  #allocation0 [shape = 'u32[]', space=smem, size = 0x4, offset = 0x4, fixed_abs, tag = 'smem constant byte address 0x4 - core index']
  #allocation1 [shape = 'u32[72,128]{1,0:T(1,128)}', space=vmem, size = 0x9000, scoped, tag = 'internal scratch']
  %s0 = inlined_call_operand.vmem [shape: f32[2,8,256], index: 0, kind: input, shape index: {}]
  %s1 = inlined_call_operand.vmem [shape: f32[8,8], index: 1, kind: input, shape index: {}]
  %s2 = inlined_call_operand.vmem [shape: f32[8,1], index: 2, kind: input, shape index: {}]
  %s3 = inlined_call_operand.vmem [shape: f32[8,1], index: 3, kind: input, shape index: {}]
  %s4 = inlined_call_operand.vmem [shape: f32[2,8,256], index: 4, kind: output, shape index: {}]
  %s5 = sld [smem:[#allocation0]]
  $region49: #{crosstalk_pallas.1} parent=0
    _
  %s7 = ssub.s32 1, %s5
  %s8 = scalar_select 0, %s7, %s5
  loop: start=0, step=1, limit=4
  $region2: #{crosstalk_pallas.1} parent=0 // loop_pre_header
    _
  $region3: #{crosstalk_pallas.1} parent=0 // loop_header
    %s10 = sphi 0, %s14
    %p11 = scmp.ge.s32.totalorder %s10, 4
    %s17 = sphi 0, %s29
    %s18 = sphi 0, %s25
    %s19 = sphi 0, %s17
    %s20 = sphi 0, %s18
    %s21 = sphi 0, %s19
    %s22 = sphi 0, %s20
    %s34 = sphi 0, %s36
    %s37 = sphi 0, %s34
    %s38 = sphi 0, %s37
    %s54 = sphi 0, %s38
    %s58 = sphi 0, %s58
    %s60 = sphi 0, %s58
    %s61 = sphi 0, %s60
    %s75 = sphi 0, %s61
    %s79 = sphi 0, %s79
    %s81 = sphi 0, %s79
    %s82 = sphi 0, %s81
    %s96 = sphi 0, %s82
    %s100 = sphi 0, %s100
    %s102 = sphi 0, %s100
    %s103 = sphi 0, %s102
    %s117 = sphi 0, %s103
    %s125 = sphi 0, %s127
    %s128 = sphi 0, %s125
    %s129 = sphi 0, %s128
    %s145 = sphi 0, %s129
  $region4: #{crosstalk_pallas.1} parent=0 // loop_header_branch
    %13 = sbr.rel (%p11) target = $region8
  $region5: #{crosstalk_pallas.1} parent=0 // loop_body
    %s15 = ssub.s32 %s10, 1
    %s16 = ssub.s32 %s10, 2
    %s23 = sadd.s32 1, %s18
    %p24 = scmp.ge.s32.totalorder %s23, 1
    %s25 = scalar_select %p24, 0, %s23
    %s26 = sadd.s32 1, %s17
    %s27 = scalar_select %p24, %s26, %s17
    %p28 = scmp.ge.s32.totalorder %s27, 2
    %s29 = scalar_select %p28, 0, %s27
    %s30 = ssub.s32 %s17, %s29
    %s31 = ssub.s32 %s18, %s25
    %s32 = sor.u32 %s30, %s31
    %p33 = scmp.eq.s32.totalorder %s32, 0
    %s35 = sadd.s32 %s34, 1
    %s36 = scalar_select %p33, %s34, %s35
    %p39 = pneg %p33
    %p40 = scmp.eq.s32.totalorder %s10, 1
    %p41 = por %p39, %p40
    %p42 = scmp.ne.s32.totalorder %s34, %s37
    %p43 = scmp.eq.s32.totalorder %s10, 0
    %p44 = por %p42, %p43
    %p45 = scmp.ne.s32.totalorder %s34, %s37
    %p46 = scmp.eq.s32.totalorder %s15, 1
    %p47 = por %p45, %p46
    %p48 = scmp.ne.s32.totalorder %s37, %s38
    %p49 = scmp.eq.s32.totalorder %s15, 0
    %p50 = por %p48, %p49
    %p51 = scmp.ne.s32.totalorder %s37, %s38
    %p52 = scmp.eq.s32.totalorder %s16, 1
    %p53 = por %p51, %p52
    %p55 = scmp.ne.s32.totalorder %s38, %s54
    %p56 = scmp.eq.s32.totalorder %s16, 0
    %p57 = por %p55, %p56
    %s59 = sadd.s32 %s58, 1
    %p62 = scmp.eq.s32.totalorder %s10, 1
    %p63 = scmp.ne.s32.totalorder %s58, %s60
    %p64 = scmp.eq.s32.totalorder %s10, 0
    %p65 = por %p63, %p64
    %p66 = scmp.ne.s32.totalorder %s58, %s60
    %p67 = scmp.eq.s32.totalorder %s15, 1
    %p68 = por %p66, %p67
    %p69 = scmp.ne.s32.totalorder %s60, %s61
    %p70 = scmp.eq.s32.totalorder %s15, 0
    %p71 = por %p69, %p70
    %p72 = scmp.ne.s32.totalorder %s60, %s61
    %p73 = scmp.eq.s32.totalorder %s16, 1
    %p74 = por %p72, %p73
    %p76 = scmp.ne.s32.totalorder %s61, %s75
    %p77 = scmp.eq.s32.totalorder %s16, 0
    %p78 = por %p76, %p77
    %s80 = sadd.s32 %s79, 1
    %p83 = scmp.eq.s32.totalorder %s10, 1
    %p84 = scmp.ne.s32.totalorder %s79, %s81
    %p85 = scmp.eq.s32.totalorder %s10, 0
    %p86 = por %p84, %p85
    %p87 = scmp.ne.s32.totalorder %s79, %s81
    %p88 = scmp.eq.s32.totalorder %s15, 1
    %p89 = por %p87, %p88
    %p90 = scmp.ne.s32.totalorder %s81, %s82
    %p91 = scmp.eq.s32.totalorder %s15, 0
    %p92 = por %p90, %p91
    %p93 = scmp.ne.s32.totalorder %s81, %s82
    %p94 = scmp.eq.s32.totalorder %s16, 1
    %p95 = por %p93, %p94
    %p97 = scmp.ne.s32.totalorder %s82, %s96
    %p98 = scmp.eq.s32.totalorder %s16, 0
    %p99 = por %p97, %p98
    %s101 = sadd.s32 %s100, 1
    %p104 = scmp.eq.s32.totalorder %s10, 1
    %p105 = scmp.ne.s32.totalorder %s100, %s102
    %p106 = scmp.eq.s32.totalorder %s10, 0
    %p107 = por %p105, %p106
    %p108 = scmp.ne.s32.totalorder %s100, %s102
    %p109 = scmp.eq.s32.totalorder %s15, 1
    %p110 = por %p108, %p109
    %p111 = scmp.ne.s32.totalorder %s102, %s103
    %p112 = scmp.eq.s32.totalorder %s15, 0
    %p113 = por %p111, %p112
    %p114 = scmp.ne.s32.totalorder %s102, %s103
    %p115 = scmp.eq.s32.totalorder %s16, 1
    %p116 = por %p114, %p115
    %p118 = scmp.ne.s32.totalorder %s103, %s117
    %p119 = scmp.eq.s32.totalorder %s16, 0
    %p120 = por %p118, %p119
    %s121 = ssub.s32 %s17, %s29
    %s122 = ssub.s32 %s18, %s25
    %s123 = sor.u32 %s121, %s122
    %p124 = scmp.eq.s32.totalorder %s123, 0
    %s126 = sadd.s32 %s125, 1
    %s127 = scalar_select %p124, %s125, %s126
    %p130 = pneg %p124
    %p131 = scmp.eq.s32.totalorder %s10, 1
    %p132 = por %p130, %p131
    %p133 = scmp.ne.s32.totalorder %s125, %s128
    %p134 = scmp.eq.s32.totalorder %s10, 0
    %p135 = por %p133, %p134
    %p136 = scmp.ne.s32.totalorder %s125, %s128
    %p137 = scmp.eq.s32.totalorder %s15, 1
    %p138 = por %p136, %p137
    %p139 = scmp.ne.s32.totalorder %s128, %s129
    %p140 = scmp.eq.s32.totalorder %s15, 0
    %p141 = por %p139, %p140
    %p142 = scmp.ne.s32.totalorder %s128, %s129
    %p143 = scmp.eq.s32.totalorder %s16, 1
    %p144 = por %p142, %p143
    %p146 = scmp.ne.s32.totalorder %s129, %s145
    %p147 = scmp.eq.s32.totalorder %s16, 0
    %p148 = por %p146, %p147
    %p149 = scmp.le.s32.totalorder 1, %s10
    %p150 = scmp.lt.s32.totalorder %s10, 3
    %p151 = pnand %p149, %p150
    %p152 = pneg %p151
    // Predicated region
    $region9: #{crosstalk_pallas.1} parent=5 // pred_check
      _
    $region10: #{crosstalk_pallas.1} parent=5 // pred_check_branch
      %154 = sbr.rel (%p151) target = $region12
    $region11: #{crosstalk_pallas.1} parent=5 // pred_region
      %s155 = ssub.s32 %s10, 1
      // Predicated region
      $region13: #{crosstalk_pallas.1} parent=11 // pred_check
        %p156 = pneg %p71
      $region14: #{crosstalk_pallas.1} parent=11 // pred_check_branch
        %158 = sbr.rel (%p156) target = $region16
      $region15: #{crosstalk_pallas.1} parent=11 // pred_region
        _
      $region16: #{crosstalk_pallas.1} parent=11 // pred_fallthru
        _
      // Predicated region
      $region17: #{crosstalk_pallas.1} parent=11 // pred_check
        %p159 = pneg %p92
      $region18: #{crosstalk_pallas.1} parent=11 // pred_check_branch
        %161 = sbr.rel (%p159) target = $region20
      $region19: #{crosstalk_pallas.1} parent=11 // pred_region
        _
      $region20: #{crosstalk_pallas.1} parent=11 // pred_fallthru
        _
      // Predicated region
      $region21: #{crosstalk_pallas.1} parent=11 // pred_check
        %p162 = pneg %p113
      $region22: #{crosstalk_pallas.1} parent=11 // pred_check_branch
        %164 = sbr.rel (%p162) target = $region24
      $region23: #{crosstalk_pallas.1} parent=11 // pred_region
        _
      $region24: #{crosstalk_pallas.1} parent=11 // pred_fallthru
        _
    $region12: #{crosstalk_pallas.1} parent=5 // pred_fallthru
      _
    %p165 = scmp.lt.s32.totalorder %s10, 2
    // Predicated region
    $region25: #{crosstalk_pallas.1} parent=5 // pred_check
      %p166 = pneg %p165
    $region26: #{crosstalk_pallas.1} parent=5 // pred_check_branch
      %168 = sbr.rel (%p166) target = $region28
    $region27: #{crosstalk_pallas.1} parent=5 // pred_region
      // Predicated region
      $region29: #{crosstalk_pallas.1} parent=27 // pred_check
        %p169 = pneg %p44
      $region30: #{crosstalk_pallas.1} parent=27 // pred_check_branch
        %171 = sbr.rel (%p169) target = $region32
      $region31: #{crosstalk_pallas.1} parent=27 // pred_region
        %s172 = smul.u32 2, %s18
        %p173 = scmp.lt.s32.totalorder %s17, 1
        %s174 = scalar_select %p173, %s17, 1
        %p175 = scmp.lt.s32.totalorder %s172, 1
        %s176 = scalar_select %p175, %s172, 1
        %s177 = smul.addr %s174, 2
        %s178 = sadd.s32 %s176, %s177
        %s179 = smul.addr %s178, 8
        %s180 = scalar_lea.vmem %s0, %s179
        %s181 = smul.u32 2, %s18
      $region32: #{crosstalk_pallas.1} parent=27 // pred_fallthru
        _
    $region28: #{crosstalk_pallas.1} parent=5 // pred_fallthru
      _
    %p182 = scmp.le.s32.totalorder 1, %s10
    %p183 = scmp.lt.s32.totalorder %s10, 3
    %p184 = pnand %p182, %p183
    %p185 = pneg %p184
    // Predicated region
    $region33: #{crosstalk_pallas.1} parent=5 // pred_check
      _
    $region34: #{crosstalk_pallas.1} parent=5 // pred_check_branch
      %187 = sbr.rel (%p184) target = $region36
    $region35: #{crosstalk_pallas.1} parent=5 // pred_region
      %s188 = ssub.s32 %s10, 1
      %s189 = smul.u32 2, %s20
      %p190 = scmp.lt.s32.totalorder %s19, 1
      %s191 = scalar_select %p190, %s19, 1
      %p192 = scmp.lt.s32.totalorder %s189, 1
      %s193 = scalar_select %p192, %s189, 1
      %s194 = smul.addr %s191, 2
      %s195 = sadd.s32 %s193, %s194
      %s196 = smul.addr %s195, 8
      %s197 = scalar_lea.vmem %s0, %s196
      %p198 = pneg %p50
      %p199 = pneg %p47
      %p200 = pneg %p71
      %p201 = pneg %p68
      %p202 = pneg %p92
      %p203 = pneg %p89
      %p204 = pneg %p113
      %p205 = pneg %p110
      %p206 = pneg %p141
      %p207 = pneg %p138
      %s208 = smul.u32 2, %s20
      %p209 = scmp.lt.s32.totalorder %s19, 1
      %s210 = scalar_select %p209, %s19, 1
      %p211 = scmp.lt.s32.totalorder %s208, 1
      %s212 = scalar_select %p211, %s208, 1
      %s213 = smul.addr %s210, 2
      %s214 = sadd.s32 %s212, %s213
      %s215 = smul.addr %s214, 8
      %s216 = scalar_lea.vmem %s4, %s215
      %s217 = smul.u32 2, %s20
      %p218 = scmp.lt.s32.totalorder %s19, 1
      %s219 = scalar_select %p218, %s19, 1
      %p220 = scmp.lt.s32.totalorder %s217, 1
      %s221 = scalar_select %p220, %s217, 1
      %s222 = smul.addr %s219, 2
      %s223 = sadd.s32 %s221, %s222
      %s224 = smul.addr %s223, 8
      %s225 = scalar_lea.vmem %s0, %s224
      %s226 = smul.u32 2, %s20
      %s227 = smul.u32 2, %s20
      %p228 = scmp.lt.s32.totalorder %s19, 1
      %s229 = scalar_select %p228, %s19, 1
      %p230 = scmp.lt.s32.totalorder %s227, 1
      %s231 = scalar_select %p230, %s227, 1
      %s232 = smul.addr %s229, 2
      %s233 = sadd.s32 %s231, %s232
      %s234 = smul.addr %s233, 8
      %s235 = scalar_lea.vmem %s4, %s234
      %s236 = smul.u32 2, %s20
      %v237 = vld [vmem:[%s225] sm:$0xff]
      %v238 = vld [vmem:[%s225 + $0x8] sm:$0xff]
      %v239 = vld [vmem:[%s1] sm:$0xff]
      %vm240 = vcmask 64512
      %v242 = vsel %vm240, %v239, 0
      %244 = vmatpush.msra.mxu0 0.0
      %245 = vmatpush.msra.mxu0 0.0
      %246 = vmatpush.msra.mxu0 0.0
      %247 = vmatpush.msra.mxu0 0.0
      %248 = vmatpush.msra.mxu0 0.0
      %249 = vmatpush.msra.mxu0 0.0
      %250 = vmatpush.msra.mxu0 0.0
      %251 = vmatpush.msra.mxu0 0.0
      %252 = vmatpush.msra.mxu0 0.0
      %253 = vmatpush.msra.mxu0 0.0
      %254 = vmatpush.msra.mxu0 0.0
      %255 = vmatpush.msra.mxu0 0.0
      %256 = vmatpush.msra.mxu0 0.0
      %257 = vmatpush.msra.mxu0 0.0
      %258 = vmatpush.msra.mxu0 0.0
      %259 = vmatpush.msra.mxu0 %v237
      %260 = vmatmul.f32.gmra.mxu0 %v242
      %v261 = vpop.f32.mrf.mxu0
      %v262 = vadd.f32 0.0, %v261
      %263 = vdwg.mxu0
      %264 = vmatpush.msra.mxu0 0.0
      %265 = vmatpush.msra.mxu0 0.0
      %266 = vmatpush.msra.mxu0 0.0
      %267 = vmatpush.msra.mxu0 0.0
      %268 = vmatpush.msra.mxu0 0.0
      %269 = vmatpush.msra.mxu0 0.0
      %270 = vmatpush.msra.mxu0 0.0
      %271 = vmatpush.msra.mxu0 0.0
      %272 = vmatpush.msra.mxu0 0.0
      %273 = vmatpush.msra.mxu0 0.0
      %274 = vmatpush.msra.mxu0 0.0
      %275 = vmatpush.msra.mxu0 0.0
      %276 = vmatpush.msra.mxu0 0.0
      %277 = vmatpush.msra.mxu0 0.0
      %278 = vmatpush.msra.mxu0 0.0
      %279 = vmatpush.msra.mxu0 %v238
      %280 = vmatmul.f32.gmra.mxu0 %v242
      %v281 = vpop.f32.mrf.mxu0
      %v282 = vadd.f32 0.0, %v281
      %283 = vdwg.mxu0
      %v284 = vrot.slane %v262, 4
      %v285 = vadd.f32 %v262, %v284
      %v286 = vrot.slane %v285, 2
      %v287 = vadd.f32 %v285, %v286
      %v288 = vrot.slane %v287, 1
      %v289 = vadd.f32 %v287, %v288
      %v290 = vrot.slane %v282, 4
      %v291 = vadd.f32 %v282, %v290
      %v292 = vrot.slane %v291, 2
      %v293 = vadd.f32 %v291, %v292
      %v294 = vrot.slane %v293, 1
      %v295 = vadd.f32 %v293, %v294
      %v296 = vmul.f32 %v289, 0.125
      %v297 = vmul.f32 %v295, 0.125
      %v298 = vsub.f32 %v262, %v296
      %v299 = vsub.f32 %v282, %v297
      %v300 = vmul.f32 %v298, %v298
      %v301 = vmul.f32 %v299, %v299
      %v302 = vrot.slane %v300, 4
      %v303 = vadd.f32 %v300, %v302
      %v304 = vrot.slane %v303, 2
      %v305 = vadd.f32 %v303, %v304
      %v306 = vrot.slane %v305, 1
      %v307 = vadd.f32 %v305, %v306
      %v308 = vrot.slane %v301, 4
      %v309 = vadd.f32 %v301, %v308
      %v310 = vrot.slane %v309, 2
      %v311 = vadd.f32 %v309, %v310
      %v312 = vrot.slane %v311, 1
      %v313 = vadd.f32 %v311, %v312
      %v314 = vmul.f32 %v307, 0.125
      %v315 = vmul.f32 %v313, 0.125
      %v316 = vadd.f32 %v314, 1e-05
      %v317 = vadd.f32 %v315, 1e-05
      %v318 = vrsqrt.pop %v316
      %v319 = vmul.f32 %v318, %v316
      %v320 = vmul.f32 %v319, %v318
      %v321 = vmul.f32 0.5, %v320
      %v322 = vsub.f32 1.5, %v321
      %v323 = vmul.f32 %v318, %v322
      %vm324 = vweird.f32 %v316
      %vm325 = vweird.f32 %v318
      %vm326 = vmor %vm324, %vm325
      %v327 = vsel %vm326, %v318, %v323
      %v328 = vrsqrt.pop %v317
      %v329 = vmul.f32 %v328, %v317
      %v330 = vmul.f32 %v329, %v328
      %v331 = vmul.f32 0.5, %v330
      %v332 = vsub.f32 1.5, %v331
      %v333 = vmul.f32 %v328, %v332
      %vm334 = vweird.f32 %v317
      %vm335 = vweird.f32 %v328
      %vm336 = vmor %vm334, %vm335
      %v337 = vsel %vm336, %v328, %v333
      %v338 = vmul.f32 %v298, %v327
      %v339 = vmul.f32 %v299, %v337
      %v340 = vld [vmem:[%s2] sm:$0xff]
      %342 = vset.pattern.permute.xlu0 0
      %343 = vperm.xlu0 %342, %v340
      %v344 = vpop.permute.xlu0 %343
      %v346 = vmul.f32 %v338, %v344
      %v347 = vmul.f32 %v339, %v344
      %v348 = vld [vmem:[%s3] sm:$0xff]
      %350 = vset.pattern.permute.xlu0 0
      %351 = vperm.xlu0 %350, %v348
      %v352 = vpop.permute.xlu0 %351
      %v354 = vadd.f32 %v346, %v352
      %v355 = vadd.f32 %v347, %v352
      %v356 = vmul.f32 %v354, 0.5
      %v357 = vmul.f32 %v355, 0.5
      %v358 = vmul.f32 %v354, 0.70710677
      %v359 = vmul.f32 %v355, 0.70710677
      %v360 = vmul.f32 %v358, %v358
      %v361 = vmin.f32 16.0, %v360
      %v362 = vmul.f32 %v361, 2.1237322e-06
      %v363 = vadd.f32 %v362, 0.00028619796
      %v364 = vmul.f32 %v361, %v363
      %v365 = vadd.f32 %v364, 0.0036580483
      %v366 = vmul.f32 %v361, %v365
      %v367 = vadd.f32 %v366, 0.05243302
      %v368 = vmul.f32 %v361, %v367
      %v369 = vadd.f32 %v368, 0.18741608
      %v370 = vmul.f32 %v361, %v369
      %v371 = vadd.f32 %v370, 1.1283791
      %v372 = vmul.f32 %v358, %v371
      %v373 = vmul.f32 %v361, 3.8918573e-05
      %v374 = vadd.f32 %v373, 0.001143296
      %v375 = vmul.f32 %v361, %v374
      %v376 = vadd.f32 %v375, 0.014752088
      %v377 = vmul.f32 %v361, %v376
      %v378 = vadd.f32 %v377, 0.112945676
      %v379 = vmul.f32 %v361, %v378
      %v380 = vadd.f32 %v379, 0.4994258
      %v381 = vmul.f32 %v361, %v380
      %v382 = vadd.f32 %v381, 1.0
      %v383 = vrcp.pop %v382
      %v384 = vmul.f32 %v382, %v383
      %v385 = vsub.f32 1.0, %v384
      %v386 = vmul.f32 %v383, %v385
      %v387 = vadd.f32 %v383, %v386
      %vm388 = vweird.f32 %v382
      %vm389 = vweird.f32 %v383
      %vm390 = vmor %vm388, %vm389
      %v391 = vsel %vm390, %v383, %v387
      %v392 = vand.u32 2147483647, %v382
      %vm393 = vcmp.eq.f32.partialorder %v392, 8.507059e+37
      %v394 = vand.u32 %v382, 2147483648
      %v395 = vor.u32 1.1754944e-38, %v394
      %v396 = vsel %vm393, %v395, %v391
      %v397 = vmul.f32 %v372, %v396
      %v398 = vmin.f32 %v397, 1.0
      %v399 = vmax.f32 %v398, -1.0
      %v400 = vmul.f32 %v359, %v359
      %v401 = vmin.f32 16.0, %v400
      %v402 = vmul.f32 %v401, 2.1237322e-06
      %v403 = vadd.f32 %v402, 0.00028619796
      %v404 = vmul.f32 %v401, %v403
      %v405 = vadd.f32 %v404, 0.0036580483
      %v406 = vmul.f32 %v401, %v405
      %v407 = vadd.f32 %v406, 0.05243302
      %v408 = vmul.f32 %v401, %v407
      %v409 = vadd.f32 %v408, 0.18741608
      %v410 = vmul.f32 %v401, %v409
      %v411 = vadd.f32 %v410, 1.1283791
      %v412 = vmul.f32 %v359, %v411
      %v413 = vmul.f32 %v401, 3.8918573e-05
      %v414 = vadd.f32 %v413, 0.001143296
      %v415 = vmul.f32 %v401, %v414
      %v416 = vadd.f32 %v415, 0.014752088
      %v417 = vmul.f32 %v401, %v416
      %v418 = vadd.f32 %v417, 0.112945676
      %v419 = vmul.f32 %v401, %v418
      %v420 = vadd.f32 %v419, 0.4994258
      %v421 = vmul.f32 %v401, %v420
      %v422 = vadd.f32 %v421, 1.0
      %v423 = vrcp.pop %v422
      %v424 = vmul.f32 %v422, %v423
      %v425 = vsub.f32 1.0, %v424
      %v426 = vmul.f32 %v423, %v425
      %v427 = vadd.f32 %v423, %v426
      %vm428 = vweird.f32 %v422
      %vm429 = vweird.f32 %v423
      %vm430 = vmor %vm428, %vm429
      %v431 = vsel %vm430, %v423, %v427
      %v432 = vand.u32 2147483647, %v422
      %vm433 = vcmp.eq.f32.partialorder %v432, 8.507059e+37
      %v434 = vand.u32 %v422, 2147483648
      %v435 = vor.u32 1.1754944e-38, %v434
      %v436 = vsel %vm433, %v435, %v431
      %v437 = vmul.f32 %v412, %v436
      %v438 = vmin.f32 %v437, 1.0
      %v439 = vmax.f32 %v438, -1.0
      %v440 = vadd.f32 %v399, 1.0
      %v441 = vadd.f32 %v439, 1.0
      %v442 = vmul.f32 %v356, %v440
      %v443 = vmul.f32 %v357, %v441
      %444 = vst [vmem:[%s235] sm:$0xff] %v442
      %445 = vst [vmem:[%s235 + $0x8] sm:$0xff] %v443
      %s446 = smul.u32 2, %s20
      %p447 = scmp.lt.s32.totalorder %s19, 1
      %s448 = scalar_select %p447, %s19, 1
      %p449 = scmp.lt.s32.totalorder %s446, 1
      %s450 = scalar_select %p449, %s446, 1
      %s451 = smul.addr %s448, 2
      %s452 = sadd.s32 %s450, %s451
      %s453 = smul.addr %s452, 8
      %s454 = scalar_lea.vmem %s4, %s453
      // Predicated region
      $region37: #{crosstalk_pallas.1} parent=35 // pred_check
        %p455 = pneg %p138
      $region38: #{crosstalk_pallas.1} parent=35 // pred_check_branch
        %457 = sbr.rel (%p455) target = $region40
      $region39: #{crosstalk_pallas.1} parent=35 // pred_region
        %s458 = smul.u32 2, %s20
      $region40: #{crosstalk_pallas.1} parent=35 // pred_fallthru
        _
    $region36: #{crosstalk_pallas.1} parent=5 // pred_fallthru
      _
    %p459 = scmp.le.s32.totalorder 2, %s10
    // Predicated region
    $region41: #{crosstalk_pallas.1} parent=5 // pred_check
      %p460 = pneg %p459
    $region42: #{crosstalk_pallas.1} parent=5 // pred_check_branch
      %462 = sbr.rel (%p460) target = $region44
    $region43: #{crosstalk_pallas.1} parent=5 // pred_region
      %s463 = ssub.s32 %s10, 2
      // Predicated region
      $region45: #{crosstalk_pallas.1} parent=43 // pred_check
        %p464 = pneg %p144
      $region46: #{crosstalk_pallas.1} parent=43 // pred_check_branch
        %466 = sbr.rel (%p464) target = $region48
      $region47: #{crosstalk_pallas.1} parent=43 // pred_region
        %s467 = smul.u32 2, %s22
        %p468 = scmp.lt.s32.totalorder %s21, 1
        %s469 = scalar_select %p468, %s21, 1
        %p470 = scmp.lt.s32.totalorder %s467, 1
        %s471 = scalar_select %p470, %s467, 1
        %s472 = smul.addr %s469, 2
        %s473 = sadd.s32 %s471, %s472
        %s474 = smul.addr %s473, 8
        %s475 = scalar_lea.vmem %s4, %s474
      $region48: #{crosstalk_pallas.1} parent=43 // pred_fallthru
        _
    $region44: #{crosstalk_pallas.1} parent=5 // pred_fallthru
      _
  $region6: #{crosstalk_pallas.1} parent=0 // loop_footer
    %s14 = sadd.s32 1, %s10
  $region7: #{crosstalk_pallas.1} parent=0 // loop_footer_branch
    %9 = sbr.rel target = $region3
  $region8: #{crosstalk_pallas.1} parent=0 // loop_exit
    _

</llo_original>
